<compile_context>
chip_gen: v7x
topology: tpu7x:2x2x1
jax: 0.10.0
libtpu: 0.0.40
codegen_flags: <defaults>
</compile_context>

<pallas_src>
import math

import jax
import jax.numpy as jnp
from jax.experimental import pallas as pl
from jax.experimental.pallas import tpu as pltpu

BN_EPS = 1e-5
LANE = 128
SUBLANE = 8


def _round_up(x, m):
    return ((x + m - 1) // m) * m


# ---------------------------------------------------------------------------
# Structure helpers (ported verbatim from the PyTorch reference)
# ---------------------------------------------------------------------------
def get_hidden_layer_size(input_size, output_size, target_n_parameters):
    return (target_n_parameters - output_size) // (input_size + output_size + 1)


def parameters_in_linear(input_size, output_size):
    return input_size * output_size + output_size


def get_hidden_units_structure(input_size, output_size, parameters_target,
                               n_hidden=5, max_hidden_layer_size=99999999):
    units_list = [input_size]
    single_interm = get_hidden_layer_size(input_size, output_size, parameters_target)
    if single_interm <= 400:
        units_list.append(single_interm)
        return units_list
    first_layer_params = parameters_in_linear(input_size, 100)
    last_layer_params = parameters_in_linear(100, output_size)
    remaining_parameters = parameters_target - first_layer_params - last_layer_params
    units_per_layer = int(max(min([(remaining_parameters / n_hidden) ** 0.5,
                                   max_hidden_layer_size]), output_size))
    units_list.extend(units_per_layer for _ in range(n_hidden))
    units_list.append(100)
    return units_list


# ---------------------------------------------------------------------------
# Kernel: whole MLP fused, single invocation, 3 inputs (x, weight slab, vector
# slab), 1 output.  All operands live as full lane-dense blocks in VMEM.
# ---------------------------------------------------------------------------
def _make_mlp_kernel(pin, pout, n_hidden_lin, b_true, b_pad, mm_dtype):
    n_lin = len(pin)  # hidden linears + output linear

    def batchnorm(h, g_row, b_row):
        # Single-pass batch stats: var = E[h^2] - E[h]^2 (biased, training mode).
        # Padded batch rows (if any) are masked out of the sums; padded feature
        # lanes are zero so they yield mean=0, var=0, gamma=0, beta=0 -> 0.
        if b_pad != b_true:
            mask = (jax.lax.broadcasted_iota(jnp.int32, (b_pad, 1), 0)
                    < b_true).astype(jnp.float32)
            hm = h * mask
        else:
            hm = h
        inv_b = 1.0 / float(b_true)
        mean = jnp.sum(hm, axis=0, keepdims=True) * inv_b
        mean_sq = jnp.sum(hm * hm, axis=0, keepdims=True) * inv_b
        var = jnp.maximum(mean_sq - mean * mean, 0.0)
        return (h - mean) * jax.lax.rsqrt(var + BN_EPS) * g_row + b_row

    def linear(h, w_ref, vec_ref, i):
        w = w_ref[i, :pin[i], :pout[i]]                     # bf16 slab slice
        b = vec_ref[2 + i:3 + i, :pout[i]]                  # f32 bias row
        return jnp.dot(h.astype(mm_dtype), w,
                       preferred_element_type=jnp.float32) + b

    def kernel(x_ref, w_ref, vec_ref, out_ref):
        h = x_ref[...]                                      # f32, zero-padded

        # BN1
        h = batchnorm(h, vec_ref[0:1, :pin[0]], vec_ref[1:2, :pin[0]])

        # hidden Linear + ReLU stack (MXU, bf16 operands, f32 accumulation)
        for i in range(n_hidden_lin):
            h = jnp.maximum(linear(h, w_ref, vec_ref, i), 0.0)

        # BN2
        d_last = pout[n_hidden_lin - 1]
        h = batchnorm(h,
                      vec_ref[2 + n_lin:3 + n_lin, :d_last],
                      vec_ref[3 + n_lin:4 + n_lin, :d_last])

        # output Linear
        out = linear(h, w_ref, vec_ref, n_lin - 1)
        out_ref[...] = out.astype(out_ref.dtype)

    return kernel


# ---------------------------------------------------------------------------
# Parameter packing: one bf16 weight slab + one f32 vector slab, lane-padded.
# ---------------------------------------------------------------------------
def build_packed_params(params, units_list, output_size, mm_dtype=jnp.bfloat16):
    dims = list(units_list) + [output_size]          # layer i: dims[i]->dims[i+1]
    n_lin = len(dims) - 1
    pin = [_round_up(d, LANE) for d in dims[:-1]]
    pout = [_round_up(d, LANE) for d in dims[1:]]
    pin_max, pout_max = max(pin), max(pout)

    layers = list(params["hidden"]) + [(params["w_out"], params["b_out"])]

    w_slab = jnp.zeros((n_lin, pin_max, pout_max), mm_dtype)
    for i, (w, _) in enumerate(layers):
        w_slab = w_slab.at[i, :w.shape[0], :w.shape[1]].set(w.astype(mm_dtype))

    vec_w = max(pin_max, pout_max)
    n_rows = _round_up(n_lin + 4, SUBLANE)
    vec_slab = jnp.zeros((n_rows, vec_w), jnp.float32)
    vec_slab = vec_slab.at[0, :dims[0]].set(params["bn1_g"].reshape(-1))
    vec_slab = vec_slab.at[1, :dims[0]].set(params["bn1_b"].reshape(-1))
    for i, (_, b) in enumerate(layers):
        vec_slab = vec_slab.at[2 + i, :b.size].set(b.reshape(-1))
    vec_slab = vec_slab.at[2 + n_lin, :dims[-2]].set(params["bn2_g"].reshape(-1))
    vec_slab = vec_slab.at[3 + n_lin, :dims[-2]].set(params["bn2_b"].reshape(-1))
    return w_slab, vec_slab, pin, pout


def mlp_forward_pallas(x, params, units_list, output_size, mm_dtype=jnp.bfloat16):
    b_true, d_in = x.shape
    assert d_in == units_list[0]

    w_slab, vec_slab, pin, pout = build_packed_params(
        params, units_list, output_size, mm_dtype)
    n_lin = len(pin)
    n_hidden_lin = n_lin - 1

    b_pad = _round_up(b_true, SUBLANE)
    d_in_pad, out_pad = pin[0], pout[-1]

    # Zero-pad x to sublane/lane-aligned shape (zeros are numerically inert).
    x_pad = jnp.zeros((b_pad, d_in_pad), jnp.float32).at[:b_true, :d_in].set(
        x.astype(jnp.float32))

    dims = list(units_list) + [output_size]
    flops = 2 * b_true * sum(dims[i] * dims[i + 1] for i in range(len(dims) - 1))
    bytes_accessed = (x_pad.size * 4 + b_pad * out_pad * 4
                      + w_slab.size * jnp.dtype(mm_dtype).itemsize
                      + vec_slab.size * 4)
    cost = pl.CostEstimate(flops=flops,
                           transcendentals=2 * (dims[0] + dims[-2]),
                           bytes_accessed=bytes_accessed)

    kernel = _make_mlp_kernel(pin, pout, n_hidden_lin, b_true, b_pad, mm_dtype)
    vmem = pl.BlockSpec(memory_space=pltpu.MemorySpace.VMEM)
    out_full = pl.pallas_call(
        kernel,
        out_shape=jax.ShapeDtypeStruct((b_pad, out_pad), jnp.float32),
        in_specs=[vmem, vmem, vmem],
        out_specs=vmem,
        cost_estimate=cost,
    )(x_pad, w_slab, vec_slab)
    return out_full[:b_true, :output_size]


# ---------------------------------------------------------------------------
# Deterministic parameter init (PyTorch-style uniform for Linear, BN defaults)
# ---------------------------------------------------------------------------
def init_params(key, units_list, output_size):
    params = {}
    d_in, d_last = units_list[0], units_list[-1]
    params["bn1_g"] = jnp.ones((1, d_in), jnp.float32)
    params["bn1_b"] = jnp.zeros((1, d_in), jnp.float32)
    params["bn2_g"] = jnp.ones((1, d_last), jnp.float32)
    params["bn2_b"] = jnp.zeros((1, d_last), jnp.float32)

    hidden = []
    for i, k in enumerate(units_list[1:]):
        fan_in = units_list[i]
        bound = 1.0 / math.sqrt(fan_in)
        key, kw, kb = jax.random.split(key, 3)
        w = jax.random.uniform(kw, (fan_in, k), jnp.float32, -bound, bound)
        b = jax.random.uniform(kb, (1, k), jnp.float32, -bound, bound)
        hidden.append((w, b))
    params["hidden"] = hidden

    bound = 1.0 / math.sqrt(d_last)
    key, kw, kb = jax.random.split(key, 3)
    params["w_out"] = jax.random.uniform(kw, (d_last, output_size), jnp.float32, -bound, bound)
    params["b_out"] = jax.random.uniform(kb, (1, output_size), jnp.float32, -bound, bound)
    return params


# ---------------------------------------------------------------------------
# Pure-JAX reference with the same bf16-operand / f32-accumulation matmuls.
# ---------------------------------------------------------------------------
def mlp_forward_ref(x, params, mm_dtype=jnp.bfloat16):
    def bn(h, g, b):
        mean = jnp.mean(h, axis=0, keepdims=True)
        var = jnp.mean((h - mean) ** 2, axis=0, keepdims=True)
        return (h - mean) / jnp.sqrt(var + BN_EPS) * g + b

    def lin(h, w, b):
        return jnp.dot(h.astype(mm_dtype), w.astype(mm_dtype),
                       preferred_element_type=jnp.float32) + b

    h = bn(x, params["bn1_g"], params["bn1_b"])
    for w, b in params["hidden"]:
        h = jnp.maximum(lin(h, w, b), 0.0)
    h = bn(h, params["bn2_g"], params["bn2_b"])
    return lin(h, params["w_out"], params["b_out"])


if __name__ == "__main__":
    # Config chosen so the "deep" branch of get_hidden_units_structure is taken:
    input_size = 16
    output_size = 4
    parameters_target = 20000
    max_hidden_layer_units = 512
    n_hidden_layers = 3
    batch = 8

    units_list = get_hidden_units_structure(
        input_size, output_size, parameters_target, n_hidden_layers,
        max_hidden_layer_units)  # -> [16, 77, 77, 77, 100]

    key = jax.random.PRNGKey(0)
    key, kx = jax.random.split(key)
    x = jax.random.normal(kx, (batch, input_size), jnp.float32)
    params = init_params(key, units_list, output_size)

    out = mlp_forward_pallas(x, params, units_list, output_size)
    out = jax.block_until_ready(out)

    ref = mlp_forward_ref(x, params)
    assert out.shape == (batch, output_size)
    assert jnp.allclose(out, ref, atol=2e-3, rtol=2e-3), "mismatch vs JAX reference"

    print("KERNEL_OK")
</pallas_src>

<mosaic_0001>
module attributes {stable_mosaic.version = 11 : i64} {
  func.func @kernel(%arg0: memref<8x128xf32, #tpu.memory_space<vmem>>, %arg1: memref<5x128x128xbf16, #tpu.memory_space<vmem>>, %arg2: memref<16x128xf32, #tpu.memory_space<vmem>>, %arg3: memref<8x128xf32, #tpu.memory_space<vmem>>) attributes {dimension_semantics = [], scalar_prefetch = 0 : i64, scratch_operands = 0 : i64, tpu.core_type = #tpu.core_type<tc>} {
    %c0 = arith.constant 0 : index
    %c0_0 = arith.constant 0 : index
    %0 = vector.load %arg0[%c0, %c0_0] : memref<8x128xf32, #tpu.memory_space<vmem>>, vector<8x128xf32>
    %c0_1 = arith.constant 0 : index
    %c0_2 = arith.constant 0 : index
    %1 = vector.load %arg2[%c0_1, %c0_2] : memref<16x128xf32, #tpu.memory_space<vmem>>, vector<1x128xf32>
    %c1 = arith.constant 1 : index
    %c0_3 = arith.constant 0 : index
    %2 = vector.load %arg2[%c1, %c0_3] : memref<16x128xf32, #tpu.memory_space<vmem>>, vector<1x128xf32>
    %cst = arith.constant dense<0.000000e+00> : vector<128xf32>
    %3 = vector.multi_reduction <add>, %0, %cst [0] : vector<8x128xf32> to vector<128xf32>
    %4 = vector.shape_cast %3 : vector<128xf32> to vector<1x128xf32>
    %cst_4 = arith.constant 1.250000e-01 : f32
    %5 = vector.broadcast %cst_4 : f32 to vector<1x128xf32>
    %6 = arith.mulf %4, %5 : vector<1x128xf32>
    %7 = arith.mulf %0, %0 : vector<8x128xf32>
    %cst_5 = arith.constant dense<0.000000e+00> : vector<128xf32>
    %8 = vector.multi_reduction <add>, %7, %cst_5 [0] : vector<8x128xf32> to vector<128xf32>
    %9 = vector.shape_cast %8 : vector<128xf32> to vector<1x128xf32>
    %cst_6 = arith.constant 1.250000e-01 : f32
    %10 = vector.broadcast %cst_6 : f32 to vector<1x128xf32>
    %11 = arith.mulf %9, %10 : vector<1x128xf32>
    %12 = arith.mulf %6, %6 : vector<1x128xf32>
    %13 = arith.subf %11, %12 : vector<1x128xf32>
    %cst_7 = arith.constant 0.000000e+00 : f32
    %14 = vector.broadcast %cst_7 : f32 to vector<1x128xf32>
    %15 = arith.maximumf %13, %14 : vector<1x128xf32>
    %16 = vector.broadcast %6 : vector<1x128xf32> to vector<8x128xf32>
    %17 = arith.subf %0, %16 : vector<8x128xf32>
    %cst_8 = arith.constant 9.99999974E-6 : f32
    %18 = vector.broadcast %cst_8 : f32 to vector<1x128xf32>
    %19 = arith.addf %15, %18 : vector<1x128xf32>
    %20 = math.rsqrt %19 : vector<1x128xf32>
    %21 = vector.broadcast %20 : vector<1x128xf32> to vector<8x128xf32>
    %22 = arith.mulf %17, %21 : vector<8x128xf32>
    %23 = vector.broadcast %1 : vector<1x128xf32> to vector<8x128xf32>
    %24 = arith.mulf %22, %23 : vector<8x128xf32>
    %25 = vector.broadcast %2 : vector<1x128xf32> to vector<8x128xf32>
    %26 = arith.addf %24, %25 : vector<8x128xf32>
    %c0_9 = arith.constant 0 : index
    %c0_10 = arith.constant 0 : index
    %c0_11 = arith.constant 0 : index
    %27 = vector.load %arg1[%c0_9, %c0_10, %c0_11] : memref<5x128x128xbf16, #tpu.memory_space<vmem>>, vector<1x128x128xbf16>
    %28 = vector.shape_cast %27 : vector<1x128x128xbf16> to vector<128x128xbf16>
    %c2 = arith.constant 2 : index
    %c0_12 = arith.constant 0 : index
    %29 = vector.load %arg2[%c2, %c0_12] : memref<16x128xf32, #tpu.memory_space<vmem>>, vector<1x128xf32>
    %30 = arith.truncf %26 : vector<8x128xf32> to vector<8x128xbf16>
    %cst_13 = arith.constant dense<0.000000e+00> : vector<8x128xf32>
    %31 = tpu.matmul %30, %28, %cst_13 {dimension_numbers = #tpu.dot_dimension_numbers<[1], [0], [0], [1], [0, 0, 1, 1], [], []>} : vector<8x128xbf16>, vector<128x128xbf16>, vector<8x128xf32> -> vector<8x128xf32>
    %32 = vector.broadcast %29 : vector<1x128xf32> to vector<8x128xf32>
    %33 = arith.addf %31, %32 : vector<8x128xf32>
    %cst_14 = arith.constant 0.000000e+00 : f32
    %34 = vector.broadcast %cst_14 : f32 to vector<8x128xf32>
    %35 = arith.maximumf %33, %34 : vector<8x128xf32>
    %c1_15 = arith.constant 1 : index
    %c0_16 = arith.constant 0 : index
    %c0_17 = arith.constant 0 : index
    %36 = vector.load %arg1[%c1_15, %c0_16, %c0_17] : memref<5x128x128xbf16, #tpu.memory_space<vmem>>, vector<1x128x128xbf16>
    %37 = vector.shape_cast %36 : vector<1x128x128xbf16> to vector<128x128xbf16>
    %c3 = arith.constant 3 : index
    %c0_18 = arith.constant 0 : index
    %38 = vector.load %arg2[%c3, %c0_18] : memref<16x128xf32, #tpu.memory_space<vmem>>, vector<1x128xf32>
    %39 = arith.truncf %35 : vector<8x128xf32> to vector<8x128xbf16>
    %cst_19 = arith.constant dense<0.000000e+00> : vector<8x128xf32>
    %40 = tpu.matmul %39, %37, %cst_19 {dimension_numbers = #tpu.dot_dimension_numbers<[1], [0], [0], [1], [0, 0, 1, 1], [], []>} : vector<8x128xbf16>, vector<128x128xbf16>, vector<8x128xf32> -> vector<8x128xf32>
    %41 = vector.broadcast %38 : vector<1x128xf32> to vector<8x128xf32>
    %42 = arith.addf %40, %41 : vector<8x128xf32>
    %cst_20 = arith.constant 0.000000e+00 : f32
    %43 = vector.broadcast %cst_20 : f32 to vector<8x128xf32>
    %44 = arith.maximumf %42, %43 : vector<8x128xf32>
    %c2_21 = arith.constant 2 : index
    %c0_22 = arith.constant 0 : index
    %c0_23 = arith.constant 0 : index
    %45 = vector.load %arg1[%c2_21, %c0_22, %c0_23] : memref<5x128x128xbf16, #tpu.memory_space<vmem>>, vector<1x128x128xbf16>
    %46 = vector.shape_cast %45 : vector<1x128x128xbf16> to vector<128x128xbf16>
    %c4 = arith.constant 4 : index
    %c0_24 = arith.constant 0 : index
    %47 = vector.load %arg2[%c4, %c0_24] : memref<16x128xf32, #tpu.memory_space<vmem>>, vector<1x128xf32>
    %48 = arith.truncf %44 : vector<8x128xf32> to vector<8x128xbf16>
    %cst_25 = arith.constant dense<0.000000e+00> : vector<8x128xf32>
    %49 = tpu.matmul %48, %46, %cst_25 {dimension_numbers = #tpu.dot_dimension_numbers<[1], [0], [0], [1], [0, 0, 1, 1], [], []>} : vector<8x128xbf16>, vector<128x128xbf16>, vector<8x128xf32> -> vector<8x128xf32>
    %50 = vector.broadcast %47 : vector<1x128xf32> to vector<8x128xf32>
    %51 = arith.addf %49, %50 : vector<8x128xf32>
    %cst_26 = arith.constant 0.000000e+00 : f32
    %52 = vector.broadcast %cst_26 : f32 to vector<8x128xf32>
    %53 = arith.maximumf %51, %52 : vector<8x128xf32>
    %c3_27 = arith.constant 3 : index
    %c0_28 = arith.constant 0 : index
    %c0_29 = arith.constant 0 : index
    %54 = vector.load %arg1[%c3_27, %c0_28, %c0_29] : memref<5x128x128xbf16, #tpu.memory_space<vmem>>, vector<1x128x128xbf16>
    %55 = vector.shape_cast %54 : vector<1x128x128xbf16> to vector<128x128xbf16>
    %c5 = arith.constant 5 : index
    %c0_30 = arith.constant 0 : index
    %56 = vector.load %arg2[%c5, %c0_30] : memref<16x128xf32, #tpu.memory_space<vmem>>, vector<1x128xf32>
    %57 = arith.truncf %53 : vector<8x128xf32> to vector<8x128xbf16>
    %cst_31 = arith.constant dense<0.000000e+00> : vector<8x128xf32>
    %58 = tpu.matmul %57, %55, %cst_31 {dimension_numbers = #tpu.dot_dimension_numbers<[1], [0], [0], [1], [0, 0, 1, 1], [], []>} : vector<8x128xbf16>, vector<128x128xbf16>, vector<8x128xf32> -> vector<8x128xf32>
    %59 = vector.broadcast %56 : vector<1x128xf32> to vector<8x128xf32>
    %60 = arith.addf %58, %59 : vector<8x128xf32>
    %cst_32 = arith.constant 0.000000e+00 : f32
    %61 = vector.broadcast %cst_32 : f32 to vector<8x128xf32>
    %62 = arith.maximumf %60, %61 : vector<8x128xf32>
    %c7 = arith.constant 7 : index
    %c0_33 = arith.constant 0 : index
    %63 = vector.load %arg2[%c7, %c0_33] : memref<16x128xf32, #tpu.memory_space<vmem>>, vector<1x128xf32>
    %c8 = arith.constant 8 : index
    %c0_34 = arith.constant 0 : index
    %64 = vector.load %arg2[%c8, %c0_34] : memref<16x128xf32, #tpu.memory_space<vmem>>, vector<1x128xf32>
    %cst_35 = arith.constant dense<0.000000e+00> : vector<128xf32>
    %65 = vector.multi_reduction <add>, %62, %cst_35 [0] : vector<8x128xf32> to vector<128xf32>
    %66 = vector.shape_cast %65 : vector<128xf32> to vector<1x128xf32>
    %cst_36 = arith.constant 1.250000e-01 : f32
    %67 = vector.broadcast %cst_36 : f32 to vector<1x128xf32>
    %68 = arith.mulf %66, %67 : vector<1x128xf32>
    %69 = arith.mulf %62, %62 : vector<8x128xf32>
    %cst_37 = arith.constant dense<0.000000e+00> : vector<128xf32>
    %70 = vector.multi_reduction <add>, %69, %cst_37 [0] : vector<8x128xf32> to vector<128xf32>
    %71 = vector.shape_cast %70 : vector<128xf32> to vector<1x128xf32>
    %cst_38 = arith.constant 1.250000e-01 : f32
    %72 = vector.broadcast %cst_38 : f32 to vector<1x128xf32>
    %73 = arith.mulf %71, %72 : vector<1x128xf32>
    %74 = arith.mulf %68, %68 : vector<1x128xf32>
    %75 = arith.subf %73, %74 : vector<1x128xf32>
    %cst_39 = arith.constant 0.000000e+00 : f32
    %76 = vector.broadcast %cst_39 : f32 to vector<1x128xf32>
    %77 = arith.maximumf %75, %76 : vector<1x128xf32>
    %78 = vector.broadcast %68 : vector<1x128xf32> to vector<8x128xf32>
    %79 = arith.subf %62, %78 : vector<8x128xf32>
    %cst_40 = arith.constant 9.99999974E-6 : f32
    %80 = vector.broadcast %cst_40 : f32 to vector<1x128xf32>
    %81 = arith.addf %77, %80 : vector<1x128xf32>
    %82 = math.rsqrt %81 : vector<1x128xf32>
    %83 = vector.broadcast %82 : vector<1x128xf32> to vector<8x128xf32>
    %84 = arith.mulf %79, %83 : vector<8x128xf32>
    %85 = vector.broadcast %63 : vector<1x128xf32> to vector<8x128xf32>
    %86 = arith.mulf %84, %85 : vector<8x128xf32>
    %87 = vector.broadcast %64 : vector<1x128xf32> to vector<8x128xf32>
    %88 = arith.addf %86, %87 : vector<8x128xf32>
    %c4_41 = arith.constant 4 : index
    %c0_42 = arith.constant 0 : index
    %c0_43 = arith.constant 0 : index
    %89 = vector.load %arg1[%c4_41, %c0_42, %c0_43] : memref<5x128x128xbf16, #tpu.memory_space<vmem>>, vector<1x128x128xbf16>
    %90 = vector.shape_cast %89 : vector<1x128x128xbf16> to vector<128x128xbf16>
    %c6 = arith.constant 6 : index
    %c0_44 = arith.constant 0 : index
    %91 = vector.load %arg2[%c6, %c0_44] : memref<16x128xf32, #tpu.memory_space<vmem>>, vector<1x128xf32>
    %92 = arith.truncf %88 : vector<8x128xf32> to vector<8x128xbf16>
    %cst_45 = arith.constant dense<0.000000e+00> : vector<8x128xf32>
    %93 = tpu.matmul %92, %90, %cst_45 {dimension_numbers = #tpu.dot_dimension_numbers<[1], [0], [0], [1], [0, 0, 1, 1], [], []>} : vector<8x128xbf16>, vector<128x128xbf16>, vector<8x128xf32> -> vector<8x128xf32>
    %94 = vector.broadcast %91 : vector<1x128xf32> to vector<8x128xf32>
    %95 = arith.addf %93, %94 : vector<8x128xf32>
    %c0_46 = arith.constant 0 : index
    %c0_47 = arith.constant 0 : index
    %96 = vector.load %arg3[%c0_46, %c0_47] : memref<8x128xf32, #tpu.memory_space<vmem>>, vector<8x128xf32>
    tpu.vector_store %arg3[%c0_46, %c0_47], %95 {strides = array<i32>} : memref<8x128xf32, #tpu.memory_space<vmem>>, vector<8x128xf32>,
    return
  }
}

</mosaic_0001>

<llo_original>
// kernel: tpu_custom_call.1
$region0: #{tpu_custom_call.1}
  #allocation0 [shape = 'u32[]', space=smem, size = 0x4, offset = 0x4, fixed_abs, tag = 'smem constant byte address 0x4 - core index']
  #allocation1 [shape = 'u32[144,128]{1,0:T(1,128)}', space=vmem, size = 0x12000, scoped, tag = 'internal scratch']
  %s0 = inlined_call_operand.hbm [shape: f32[8,128], index: 0, kind: input, shape index: {}]
  %s1 = inlined_call_operand.hbm [shape: bf16[5,128,128], index: 1, kind: input, shape index: {}]
  %s2 = inlined_call_operand.hbm [shape: f32[16,128], index: 2, kind: input, shape index: {}]
  %s3 = inlined_call_operand.hbm [shape: f32[8,128], index: 3, kind: output, shape index: {}]
  %s4 = sld [smem:[#allocation0]]
  $region34: #{tpu_custom_call.1} parent=0
    _
  %s6 = ssub.s32 1, %s4
  %s7 = scalar_select 0, %s6, %s4
  $region1: #{tpu_custom_call.1} parent=0
    #allocation2 [shape = 'u8[4096]{0}', space=vmem, size = 0x1000, scoped, tag = 'input window, operand 0, single buffered']
    #allocation3 [shape = 's32[1]{0}', space=sflag, size = 0x4, scoped, tag = 'scoped memory for tpu_custom_call.1']
    #allocation4 [shape = 's32[1]{0}', space=sflag, size = 0x4, scoped, tag = 'scoped memory for tpu_custom_call.1']
    #allocation5 [shape = 'u8[163840]{0}', space=vmem, size = 0x28000, scoped, tag = 'input window, operand 1, single buffered']
    #allocation6 [shape = 's32[1]{0}', space=sflag, size = 0x4, scoped, tag = 'scoped memory for tpu_custom_call.1']
    #allocation7 [shape = 'u8[8192]{0}', space=vmem, size = 0x2000, scoped, tag = 'input window, operand 2, single buffered']
    #allocation8 [shape = 'u8[4096]{0}', space=vmem, size = 0x1000, scoped, tag = 'output window, operand 0, single buffered']
    %8 = vsyncpa [#allocation3], 0
    %9 = vsyncpa [#allocation6], 0
    %10 = vsyncpa [#allocation4], 0
    // Predicated region
    $region2: #{tpu_custom_call.1} parent=1 // pred_check
      _
    $region3: #{tpu_custom_call.1} parent=1 // pred_check_branch
      %12 = sbr.rel (0) target = $region5
    $region4: #{tpu_custom_call.1} parent=1 // pred_region
      %s14 = ssub.s32 128, 128
      %15 = vsyncadd [#allocation3], %s14
      %s17 = sshll.u32 [#allocation2], 4
      %s18 = int_to_ptr.vmem [resolvable:$true] %s17
      %20 = dma.hbm_to_vmem [thread:$0]  %s0, 128, %s18, [#allocation3]
    $region5: #{tpu_custom_call.1} parent=1 // pred_fallthru
      _
    // Predicated region
    $region6: #{tpu_custom_call.1} parent=1 // pred_check
      _
    $region7: #{tpu_custom_call.1} parent=1 // pred_check_branch
      %22 = sbr.rel (0) target = $region9
    $region8: #{tpu_custom_call.1} parent=1 // pred_region
      %s24 = ssub.s32 5120, 5120
      %25 = vsyncadd [#allocation6], %s24
      %s26 = sshll.u32 [#allocation5], 4
      %s27 = int_to_ptr.vmem [resolvable:$true] %s26
      %32 = dma.hbm_to_vmem [thread:$0]  %s1, 5120, %s27, [#allocation6], 64, 64, 4
    $region9: #{tpu_custom_call.1} parent=1 // pred_fallthru
      _
    // Predicated region
    $region10: #{tpu_custom_call.1} parent=1 // pred_check
      _
    $region11: #{tpu_custom_call.1} parent=1 // pred_check_branch
      %34 = sbr.rel (0) target = $region13
    $region12: #{tpu_custom_call.1} parent=1 // pred_region
      %s36 = ssub.s32 256, 256
      %37 = vsyncadd [#allocation6], %s36
      %s38 = sshll.u32 [#allocation7], 4
      %s39 = int_to_ptr.vmem [resolvable:$true] %s38
      %44 = dma.hbm_to_vmem [thread:$0]  %s2, 256, %s39, [#allocation6], 128, 128, 8
    $region13: #{tpu_custom_call.1} parent=1 // pred_fallthru
      _
    // Predicated region
    $region14: #{tpu_custom_call.1} parent=1 // pred_check
      _
    $region15: #{tpu_custom_call.1} parent=1 // pred_check_branch
      %46 = sbr.rel (0) target = $region17
    $region16: #{tpu_custom_call.1} parent=1 // pred_region
      %47 = dma.done [#allocation3], 128
    $region17: #{tpu_custom_call.1} parent=1 // pred_fallthru
      _
    // Predicated region
    $region18: #{tpu_custom_call.1} parent=1 // pred_check
      _
    $region19: #{tpu_custom_call.1} parent=1 // pred_check_branch
      %49 = sbr.rel (0) target = $region21
    $region20: #{tpu_custom_call.1} parent=1 // pred_region
      %50 = dma.done [#allocation6], 5120
    $region21: #{tpu_custom_call.1} parent=1 // pred_fallthru
      _
    // Predicated region
    $region22: #{tpu_custom_call.1} parent=1 // pred_check
      _
    $region23: #{tpu_custom_call.1} parent=1 // pred_check_branch
      %52 = sbr.rel (0) target = $region25
    $region24: #{tpu_custom_call.1} parent=1 // pred_region
      %53 = dma.done [#allocation6], 256
    $region25: #{tpu_custom_call.1} parent=1 // pred_fallthru
      _
    %v55 = vld [vmem:[#allocation2] sm:$0xff]
    %v56 = vld [vmem:[#allocation7] sm:$0x1]
    %v57 = vld [vmem:[#allocation7 + $0x1] sm:$0x1]
    %v58 = vrot.slane %v55, 4
    %v59 = vadd.f32 %v55, %v58
    %v60 = vrot.slane %v59, 2
    %v61 = vadd.f32 %v59, %v60
    %v62 = vrot.slane %v61, 1
    %v63 = vadd.f32 %v61, %v62
    %v64 = vmul.f32 %v63, 0.125
    %v65 = vmul.f32 %v55, %v55
    %v66 = vrot.slane %v65, 4
    %v67 = vadd.f32 %v65, %v66
    %v68 = vrot.slane %v67, 2
    %v69 = vadd.f32 %v67, %v68
    %v70 = vrot.slane %v69, 1
    %v71 = vadd.f32 %v69, %v70
    %v72 = vmul.f32 %v71, 0.125
    %v73 = vmul.f32 %v64, %v64
    %v74 = vsub.f32 %v72, %v73
    %v75 = vmax.f32 %v74, 0.0
    %v76 = vsub.f32 %v55, %v64
    %v77 = vadd.f32 %v75, 1e-05
    %v78 = vrsqrt.pop %v77
    %v79 = vmul.f32 %v76, %v78
    %v80 = vlaneseq
    %v81 = vshrl.u32 %v80, 7
    %v82 = vsub.s32 0, %v81
    %v83 = vrot.slane %v56, %v82
    %v84 = vmul.f32 %v79, %v83
    %v85 = vlaneseq
    %v86 = vshrl.u32 %v85, 7
    %v87 = vsub.s32 0, %v86
    %v88 = vrot.slane %v57, %v87
    %v89 = vadd.f32 %v84, %v88
    %v90 = vld [vmem:[#allocation5] sm:$0xf]
    %v91 = vld [vmem:[#allocation5 + $0x4] sm:$0xf]
    %v92 = vld [vmem:[#allocation5 + $0x8] sm:$0xf]
    %v93 = vld [vmem:[#allocation5 + $0xc] sm:$0xf]
    %v94 = vld [vmem:[#allocation5 + $0x10] sm:$0xf]
    %v95 = vld [vmem:[#allocation5 + $0x14] sm:$0xf]
    %v96 = vld [vmem:[#allocation5 + $0x18] sm:$0xf]
    %v97 = vld [vmem:[#allocation5 + $0x1c] sm:$0xf]
    %v98 = vld [vmem:[#allocation5 + $0x20] sm:$0xf]
    %v99 = vld [vmem:[#allocation5 + $0x24] sm:$0xf]
    %v100 = vld [vmem:[#allocation5 + $0x28] sm:$0xf]
    %v101 = vld [vmem:[#allocation5 + $0x2c] sm:$0xf]
    %v102 = vld [vmem:[#allocation5 + $0x30] sm:$0xf]
    %v103 = vld [vmem:[#allocation5 + $0x34] sm:$0xf]
    %v104 = vld [vmem:[#allocation5 + $0x38] sm:$0xf]
    %v105 = vld [vmem:[#allocation5 + $0x3c] sm:$0xf]
    %v106 = vld [vmem:[#allocation7 + $0x2] sm:$0x1]
    %v107 = vpack.c.bf16 %v89, %v89
    %v108 = vlaneseq
    %v109 = vshrl.u32 %v108, 7
    %v110 = vsub.s32 0, %v109
    %v111 = vrot.slane %v106, %v110
    %v128 = vunpack.c.l.b16 %v90
    %v129 = vunpack.c.l.b16 %v91
    %v130 = vunpack.c.l.b16 %v92
    %v131 = vunpack.c.l.b16 %v93
    %v132 = vunpack.c.l.b16 %v94
    %v133 = vunpack.c.l.b16 %v95
    %v134 = vunpack.c.l.b16 %v96
    %v135 = vunpack.c.l.b16 %v97
    %v136 = vunpack.c.l.b16 %v98
    %v137 = vunpack.c.l.b16 %v99
    %v138 = vunpack.c.l.b16 %v100
    %v139 = vunpack.c.l.b16 %v101
    %v140 = vunpack.c.l.b16 %v102
    %v141 = vunpack.c.l.b16 %v103
    %v142 = vunpack.c.l.b16 %v104
    %v143 = vunpack.c.l.b16 %v105
    %v144 = vpack.c.b16 %v129, %v128
    %v145 = vpack.c.b16 %v131, %v130
    %v146 = vpack.c.b16 %v133, %v132
    %v147 = vpack.c.b16 %v135, %v134
    %v148 = vpack.c.b16 %v137, %v136
    %v149 = vpack.c.b16 %v139, %v138
    %v150 = vpack.c.b16 %v141, %v140
    %v151 = vpack.c.b16 %v143, %v142
    %160 = vmatprep.subr.bf16.mxu0 0
    %161 = vmatpush1.bf16.msra.mxu0 %v144
    %162 = vmatprep.subr.bf16.mxu0 0
    %163 = vmatpush1.bf16.msra.mxu0 %v145
    %164 = vmatprep.subr.bf16.mxu0 0
    %165 = vmatpush1.bf16.msra.mxu0 %v146
    %166 = vmatprep.subr.bf16.mxu0 0
    %167 = vmatpush1.bf16.msra.mxu0 %v147
    %168 = vmatprep.subr.bf16.mxu0 0
    %169 = vmatpush1.bf16.msra.mxu0 %v148
    %170 = vmatprep.subr.bf16.mxu0 0
    %171 = vmatpush1.bf16.msra.mxu0 %v149
    %172 = vmatprep.subr.bf16.mxu0 0
    %173 = vmatpush1.bf16.msra.mxu0 %v150
    %174 = vmatprep.subr.bf16.mxu0 0
    %175 = vmatpush1.bf16.msra.mxu0 %v151
    %176 = vmatprep.subr.bf16.mxu0 0
    %177 = vmatpush1.bf16.msra.mxu0 0
    %178 = vmatprep.subr.bf16.mxu0 0
    %179 = vmatpush1.bf16.msra.mxu0 0
    %180 = vmatprep.subr.bf16.mxu0 0
    %181 = vmatpush1.bf16.msra.mxu0 0
    %182 = vmatprep.subr.bf16.mxu0 0
    %183 = vmatpush1.bf16.msra.mxu0 0
    %184 = vmatprep.subr.bf16.mxu0 0
    %185 = vmatpush1.bf16.msra.mxu0 0
    %186 = vmatprep.subr.bf16.mxu0 0
    %187 = vmatpush1.bf16.msra.mxu0 0
    %188 = vmatprep.subr.bf16.mxu0 0
    %189 = vmatpush1.bf16.msra.mxu0 0
    %190 = vmatprep.subr.bf16.mxu0 0
    %191 = vmatpush1.bf16.msra.mxu0 0
    %192 = vmatprep.mubr.bf16.mxu0 0
    %193 = vmatmul.mubr.bf16.gmra.mrb[0].mxu0 %v107
    %v194 = vpop.f32.mrb[0].mxu0
    %v195 = vadd.f32 %v111, %v194
    %v196 = vpop.f32.mrb[0].mxu0
    %v197 = vpop.f32.mrb[0].mxu0
    %v198 = vpop.f32.mrb[0].mxu0
    %199 = vdwg.mxu0
    %v200 = vmax.f32 %v195, 0.0
    %s201 = scalar_lea.vmem [#allocation5], 64
    %v202 = vld [vmem:[%s201] sm:$0xf]
    %v203 = vld [vmem:[%s201 + $0x4] sm:$0xf]
    %v204 = vld [vmem:[%s201 + $0x8] sm:$0xf]
    %v205 = vld [vmem:[%s201 + $0xc] sm:$0xf]
    %v206 = vld [vmem:[%s201 + $0x10] sm:$0xf]
    %v207 = vld [vmem:[%s201 + $0x14] sm:$0xf]
    %v208 = vld [vmem:[%s201 + $0x18] sm:$0xf]
    %v209 = vld [vmem:[%s201 + $0x1c] sm:$0xf]
    %v210 = vld [vmem:[%s201 + $0x20] sm:$0xf]
    %v211 = vld [vmem:[%s201 + $0x24] sm:$0xf]
    %v212 = vld [vmem:[%s201 + $0x28] sm:$0xf]
    %v213 = vld [vmem:[%s201 + $0x2c] sm:$0xf]
    %v214 = vld [vmem:[%s201 + $0x30] sm:$0xf]
    %v215 = vld [vmem:[%s201 + $0x34] sm:$0xf]
    %v216 = vld [vmem:[%s201 + $0x38] sm:$0xf]
    %v217 = vld [vmem:[%s201 + $0x3c] sm:$0xf]
    %v218 = vld [vmem:[#allocation7 + $0x3] sm:$0x1]
    %v219 = vpack.c.bf16 %v200, %v200
    %v220 = vlaneseq
    %v221 = vshrl.u32 %v220, 7
    %v222 = vsub.s32 0, %v221
    %v223 = vrot.slane %v218, %v222
    %v240 = vunpack.c.l.b16 %v202
    %v241 = vunpack.c.l.b16 %v203
    %v242 = vunpack.c.l.b16 %v204
    %v243 = vunpack.c.l.b16 %v205
    %v244 = vunpack.c.l.b16 %v206
    %v245 = vunpack.c.l.b16 %v207
    %v246 = vunpack.c.l.b16 %v208
    %v247 = vunpack.c.l.b16 %v209
    %v248 = vunpack.c.l.b16 %v210
    %v249 = vunpack.c.l.b16 %v211
    %v250 = vunpack.c.l.b16 %v212
    %v251 = vunpack.c.l.b16 %v213
    %v252 = vunpack.c.l.b16 %v214
    %v253 = vunpack.c.l.b16 %v215
    %v254 = vunpack.c.l.b16 %v216
    %v255 = vunpack.c.l.b16 %v217
    %v256 = vpack.c.b16 %v241, %v240
    %v257 = vpack.c.b16 %v243, %v242
    %v258 = vpack.c.b16 %v245, %v244
    %v259 = vpack.c.b16 %v247, %v246
    %v260 = vpack.c.b16 %v249, %v248
    %v261 = vpack.c.b16 %v251, %v250
    %v262 = vpack.c.b16 %v253, %v252
    %v263 = vpack.c.b16 %v255, %v254
    %272 = vmatprep.subr.bf16.mxu0 0
    %273 = vmatpush1.bf16.msra.mxu0 %v256
    %274 = vmatprep.subr.bf16.mxu0 0
    %275 = vmatpush1.bf16.msra.mxu0 %v257
    %276 = vmatprep.subr.bf16.mxu0 0
    %277 = vmatpush1.bf16.msra.mxu0 %v258
    %278 = vmatprep.subr.bf16.mxu0 0
    %279 = vmatpush1.bf16.msra.mxu0 %v259
    %280 = vmatprep.subr.bf16.mxu0 0
    %281 = vmatpush1.bf16.msra.mxu0 %v260
    %282 = vmatprep.subr.bf16.mxu0 0
    %283 = vmatpush1.bf16.msra.mxu0 %v261
    %284 = vmatprep.subr.bf16.mxu0 0
    %285 = vmatpush1.bf16.msra.mxu0 %v262
    %286 = vmatprep.subr.bf16.mxu0 0
    %287 = vmatpush1.bf16.msra.mxu0 %v263
    %288 = vmatprep.subr.bf16.mxu0 0
    %289 = vmatpush1.bf16.msra.mxu0 0
    %290 = vmatprep.subr.bf16.mxu0 0
    %291 = vmatpush1.bf16.msra.mxu0 0
    %292 = vmatprep.subr.bf16.mxu0 0
    %293 = vmatpush1.bf16.msra.mxu0 0
    %294 = vmatprep.subr.bf16.mxu0 0
    %295 = vmatpush1.bf16.msra.mxu0 0
    %296 = vmatprep.subr.bf16.mxu0 0
    %297 = vmatpush1.bf16.msra.mxu0 0
    %298 = vmatprep.subr.bf16.mxu0 0
    %299 = vmatpush1.bf16.msra.mxu0 0
    %300 = vmatprep.subr.bf16.mxu0 0
    %301 = vmatpush1.bf16.msra.mxu0 0
    %302 = vmatprep.subr.bf16.mxu0 0
    %303 = vmatpush1.bf16.msra.mxu0 0
    %304 = vmatprep.mubr.bf16.mxu0 0
    %305 = vmatmul.mubr.bf16.gmra.mrb[0].mxu0 %v219
    %v306 = vpop.f32.mrb[0].mxu0
    %v307 = vadd.f32 %v223, %v306
    %v308 = vpop.f32.mrb[0].mxu0
    %v309 = vpop.f32.mrb[0].mxu0
    %v310 = vpop.f32.mrb[0].mxu0
    %311 = vdwg.mxu0
    %v312 = vmax.f32 %v307, 0.0
    %s313 = scalar_lea.vmem [#allocation5], 128
    %v314 = vld [vmem:[%s313] sm:$0xf]
    %v315 = vld [vmem:[%s313 + $0x4] sm:$0xf]
    %v316 = vld [vmem:[%s313 + $0x8] sm:$0xf]
    %v317 = vld [vmem:[%s313 + $0xc] sm:$0xf]
    %v318 = vld [vmem:[%s313 + $0x10] sm:$0xf]
    %v319 = vld [vmem:[%s313 + $0x14] sm:$0xf]
    %v320 = vld [vmem:[%s313 + $0x18] sm:$0xf]
    %v321 = vld [vmem:[%s313 + $0x1c] sm:$0xf]
    %v322 = vld [vmem:[%s313 + $0x20] sm:$0xf]
    %v323 = vld [vmem:[%s313 + $0x24] sm:$0xf]
    %v324 = vld [vmem:[%s313 + $0x28] sm:$0xf]
    %v325 = vld [vmem:[%s313 + $0x2c] sm:$0xf]
    %v326 = vld [vmem:[%s313 + $0x30] sm:$0xf]
    %v327 = vld [vmem:[%s313 + $0x34] sm:$0xf]
    %v328 = vld [vmem:[%s313 + $0x38] sm:$0xf]
    %v329 = vld [vmem:[%s313 + $0x3c] sm:$0xf]
    %v330 = vld [vmem:[#allocation7 + $0x4] sm:$0x1]
    %v331 = vpack.c.bf16 %v312, %v312
    %v332 = vlaneseq
    %v333 = vshrl.u32 %v332, 7
    %v334 = vsub.s32 0, %v333
    %v335 = vrot.slane %v330, %v334
    %v352 = vunpack.c.l.b16 %v314
    %v353 = vunpack.c.l.b16 %v315
    %v354 = vunpack.c.l.b16 %v316
    %v355 = vunpack.c.l.b16 %v317
    %v356 = vunpack.c.l.b16 %v318
    %v357 = vunpack.c.l.b16 %v319
    %v358 = vunpack.c.l.b16 %v320
    %v359 = vunpack.c.l.b16 %v321
    %v360 = vunpack.c.l.b16 %v322
    %v361 = vunpack.c.l.b16 %v323
    %v362 = vunpack.c.l.b16 %v324
    %v363 = vunpack.c.l.b16 %v325
    %v364 = vunpack.c.l.b16 %v326
    %v365 = vunpack.c.l.b16 %v327
    %v366 = vunpack.c.l.b16 %v328
    %v367 = vunpack.c.l.b16 %v329
    %v368 = vpack.c.b16 %v353, %v352
    %v369 = vpack.c.b16 %v355, %v354
    %v370 = vpack.c.b16 %v357, %v356
    %v371 = vpack.c.b16 %v359, %v358
    %v372 = vpack.c.b16 %v361, %v360
    %v373 = vpack.c.b16 %v363, %v362
    %v374 = vpack.c.b16 %v365, %v364
    %v375 = vpack.c.b16 %v367, %v366
    %384 = vmatprep.subr.bf16.mxu0 0
    %385 = vmatpush1.bf16.msra.mxu0 %v368
    %386 = vmatprep.subr.bf16.mxu0 0
    %387 = vmatpush1.bf16.msra.mxu0 %v369
    %388 = vmatprep.subr.bf16.mxu0 0
    %389 = vmatpush1.bf16.msra.mxu0 %v370
    %390 = vmatprep.subr.bf16.mxu0 0
    %391 = vmatpush1.bf16.msra.mxu0 %v371
    %392 = vmatprep.subr.bf16.mxu0 0
    %393 = vmatpush1.bf16.msra.mxu0 %v372
    %394 = vmatprep.subr.bf16.mxu0 0
    %395 = vmatpush1.bf16.msra.mxu0 %v373
    %396 = vmatprep.subr.bf16.mxu0 0
    %397 = vmatpush1.bf16.msra.mxu0 %v374
    %398 = vmatprep.subr.bf16.mxu0 0
    %399 = vmatpush1.bf16.msra.mxu0 %v375
    %400 = vmatprep.subr.bf16.mxu0 0
    %401 = vmatpush1.bf16.msra.mxu0 0
    %402 = vmatprep.subr.bf16.mxu0 0
    %403 = vmatpush1.bf16.msra.mxu0 0
    %404 = vmatprep.subr.bf16.mxu0 0
    %405 = vmatpush1.bf16.msra.mxu0 0
    %406 = vmatprep.subr.bf16.mxu0 0
    %407 = vmatpush1.bf16.msra.mxu0 0
    %408 = vmatprep.subr.bf16.mxu0 0
    %409 = vmatpush1.bf16.msra.mxu0 0
    %410 = vmatprep.subr.bf16.mxu0 0
    %411 = vmatpush1.bf16.msra.mxu0 0
    %412 = vmatprep.subr.bf16.mxu0 0
    %413 = vmatpush1.bf16.msra.mxu0 0
    %414 = vmatprep.subr.bf16.mxu0 0
    %415 = vmatpush1.bf16.msra.mxu0 0
    %416 = vmatprep.mubr.bf16.mxu0 0
    %417 = vmatmul.mubr.bf16.gmra.mrb[0].mxu0 %v331
    %v418 = vpop.f32.mrb[0].mxu0
    %v419 = vadd.f32 %v335, %v418
    %v420 = vpop.f32.mrb[0].mxu0
    %v421 = vpop.f32.mrb[0].mxu0
    %v422 = vpop.f32.mrb[0].mxu0
    %423 = vdwg.mxu0
    %v424 = vmax.f32 %v419, 0.0
    %s425 = scalar_lea.vmem [#allocation5], 192
    %v426 = vld [vmem:[%s425] sm:$0xf]
    %v427 = vld [vmem:[%s425 + $0x4] sm:$0xf]
    %v428 = vld [vmem:[%s425 + $0x8] sm:$0xf]
    %v429 = vld [vmem:[%s425 + $0xc] sm:$0xf]
    %v430 = vld [vmem:[%s425 + $0x10] sm:$0xf]
    %v431 = vld [vmem:[%s425 + $0x14] sm:$0xf]
    %v432 = vld [vmem:[%s425 + $0x18] sm:$0xf]
    %v433 = vld [vmem:[%s425 + $0x1c] sm:$0xf]
    %v434 = vld [vmem:[%s425 + $0x20] sm:$0xf]
    %v435 = vld [vmem:[%s425 + $0x24] sm:$0xf]
    %v436 = vld [vmem:[%s425 + $0x28] sm:$0xf]
    %v437 = vld [vmem:[%s425 + $0x2c] sm:$0xf]
    %v438 = vld [vmem:[%s425 + $0x30] sm:$0xf]
    %v439 = vld [vmem:[%s425 + $0x34] sm:$0xf]
    %v440 = vld [vmem:[%s425 + $0x38] sm:$0xf]
    %v441 = vld [vmem:[%s425 + $0x3c] sm:$0xf]
    %v442 = vld [vmem:[#allocation7 + $0x5] sm:$0x1]
    %v443 = vpack.c.bf16 %v424, %v424
    %v444 = vlaneseq
    %v445 = vshrl.u32 %v444, 7
    %v446 = vsub.s32 0, %v445
    %v447 = vrot.slane %v442, %v446
    %v464 = vunpack.c.l.b16 %v426
    %v465 = vunpack.c.l.b16 %v427
    %v466 = vunpack.c.l.b16 %v428
    %v467 = vunpack.c.l.b16 %v429
    %v468 = vunpack.c.l.b16 %v430
    %v469 = vunpack.c.l.b16 %v431
    %v470 = vunpack.c.l.b16 %v432
    %v471 = vunpack.c.l.b16 %v433
    %v472 = vunpack.c.l.b16 %v434
    %v473 = vunpack.c.l.b16 %v435
    %v474 = vunpack.c.l.b16 %v436
    %v475 = vunpack.c.l.b16 %v437
    %v476 = vunpack.c.l.b16 %v438
    %v477 = vunpack.c.l.b16 %v439
    %v478 = vunpack.c.l.b16 %v440
    %v479 = vunpack.c.l.b16 %v441
    %v480 = vpack.c.b16 %v465, %v464
    %v481 = vpack.c.b16 %v467, %v466
    %v482 = vpack.c.b16 %v469, %v468
    %v483 = vpack.c.b16 %v471, %v470
    %v484 = vpack.c.b16 %v473, %v472
    %v485 = vpack.c.b16 %v475, %v474
    %v486 = vpack.c.b16 %v477, %v476
    %v487 = vpack.c.b16 %v479, %v478
    %496 = vmatprep.subr.bf16.mxu0 0
    %497 = vmatpush1.bf16.msra.mxu0 %v480
    %498 = vmatprep.subr.bf16.mxu0 0
    %499 = vmatpush1.bf16.msra.mxu0 %v481
    %500 = vmatprep.subr.bf16.mxu0 0
    %501 = vmatpush1.bf16.msra.mxu0 %v482
    %502 = vmatprep.subr.bf16.mxu0 0
    %503 = vmatpush1.bf16.msra.mxu0 %v483
    %504 = vmatprep.subr.bf16.mxu0 0
    %505 = vmatpush1.bf16.msra.mxu0 %v484
    %506 = vmatprep.subr.bf16.mxu0 0
    %507 = vmatpush1.bf16.msra.mxu0 %v485
    %508 = vmatprep.subr.bf16.mxu0 0
    %509 = vmatpush1.bf16.msra.mxu0 %v486
    %510 = vmatprep.subr.bf16.mxu0 0
    %511 = vmatpush1.bf16.msra.mxu0 %v487
    %512 = vmatprep.subr.bf16.mxu0 0
    %513 = vmatpush1.bf16.msra.mxu0 0
    %514 = vmatprep.subr.bf16.mxu0 0
    %515 = vmatpush1.bf16.msra.mxu0 0
    %516 = vmatprep.subr.bf16.mxu0 0
    %517 = vmatpush1.bf16.msra.mxu0 0
    %518 = vmatprep.subr.bf16.mxu0 0
    %519 = vmatpush1.bf16.msra.mxu0 0
    %520 = vmatprep.subr.bf16.mxu0 0
    %521 = vmatpush1.bf16.msra.mxu0 0
    %522 = vmatprep.subr.bf16.mxu0 0
    %523 = vmatpush1.bf16.msra.mxu0 0
    %524 = vmatprep.subr.bf16.mxu0 0
    %525 = vmatpush1.bf16.msra.mxu0 0
    %526 = vmatprep.subr.bf16.mxu0 0
    %527 = vmatpush1.bf16.msra.mxu0 0
    %528 = vmatprep.mubr.bf16.mxu0 0
    %529 = vmatmul.mubr.bf16.gmra.mrb[0].mxu0 %v443
    %v530 = vpop.f32.mrb[0].mxu0
    %v531 = vadd.f32 %v447, %v530
    %v532 = vpop.f32.mrb[0].mxu0
    %v533 = vpop.f32.mrb[0].mxu0
    %v534 = vpop.f32.mrb[0].mxu0
    %535 = vdwg.mxu0
    %v536 = vmax.f32 %v531, 0.0
    %v537 = vld [vmem:[#allocation7 + $0x7] sm:$0x1]
    %v538 = vld [vmem:[#allocation7 + $0x8] sm:$0x1]
    %v539 = vrot.slane %v536, 4
    %v540 = vadd.f32 %v536, %v539
    %v541 = vrot.slane %v540, 2
    %v542 = vadd.f32 %v540, %v541
    %v543 = vrot.slane %v542, 1
    %v544 = vadd.f32 %v542, %v543
    %v545 = vmul.f32 %v544, 0.125
    %v546 = vmul.f32 %v536, %v536
    %v547 = vrot.slane %v546, 4
    %v548 = vadd.f32 %v546, %v547
    %v549 = vrot.slane %v548, 2
    %v550 = vadd.f32 %v548, %v549
    %v551 = vrot.slane %v550, 1
    %v552 = vadd.f32 %v550, %v551
    %v553 = vmul.f32 %v552, 0.125
    %v554 = vmul.f32 %v545, %v545
    %v555 = vsub.f32 %v553, %v554
    %v556 = vmax.f32 %v555, 0.0
    %v557 = vsub.f32 %v536, %v545
    %v558 = vadd.f32 %v556, 1e-05
    %v559 = vrsqrt.pop %v558
    %v560 = vmul.f32 %v557, %v559
    %v561 = vlaneseq
    %v562 = vshrl.u32 %v561, 7
    %v563 = vsub.s32 0, %v562
    %v564 = vrot.slane %v537, %v563
    %v565 = vmul.f32 %v560, %v564
    %v566 = vlaneseq
    %v567 = vshrl.u32 %v566, 7
    %v568 = vsub.s32 0, %v567
    %v569 = vrot.slane %v538, %v568
    %v570 = vadd.f32 %v565, %v569
    %s571 = scalar_lea.vmem [#allocation5], 256
    %v572 = vld [vmem:[%s571] sm:$0xf]
    %v573 = vld [vmem:[%s571 + $0x4] sm:$0xf]
    %v574 = vld [vmem:[%s571 + $0x8] sm:$0xf]
    %v575 = vld [vmem:[%s571 + $0xc] sm:$0xf]
    %v576 = vld [vmem:[%s571 + $0x10] sm:$0xf]
    %v577 = vld [vmem:[%s571 + $0x14] sm:$0xf]
    %v578 = vld [vmem:[%s571 + $0x18] sm:$0xf]
    %v579 = vld [vmem:[%s571 + $0x1c] sm:$0xf]
    %v580 = vld [vmem:[%s571 + $0x20] sm:$0xf]
    %v581 = vld [vmem:[%s571 + $0x24] sm:$0xf]
    %v582 = vld [vmem:[%s571 + $0x28] sm:$0xf]
    %v583 = vld [vmem:[%s571 + $0x2c] sm:$0xf]
    %v584 = vld [vmem:[%s571 + $0x30] sm:$0xf]
    %v585 = vld [vmem:[%s571 + $0x34] sm:$0xf]
    %v586 = vld [vmem:[%s571 + $0x38] sm:$0xf]
    %v587 = vld [vmem:[%s571 + $0x3c] sm:$0xf]
    %v588 = vld [vmem:[#allocation7 + $0x6] sm:$0x1]
    %v589 = vpack.c.bf16 %v570, %v570
    %v590 = vlaneseq
    %v591 = vshrl.u32 %v590, 7
    %v592 = vsub.s32 0, %v591
    %v593 = vrot.slane %v588, %v592
    %v610 = vunpack.c.l.b16 %v572
    %v611 = vunpack.c.l.b16 %v573
    %v612 = vunpack.c.l.b16 %v574
    %v613 = vunpack.c.l.b16 %v575
    %v614 = vunpack.c.l.b16 %v576
    %v615 = vunpack.c.l.b16 %v577
    %v616 = vunpack.c.l.b16 %v578
    %v617 = vunpack.c.l.b16 %v579
    %v618 = vunpack.c.l.b16 %v580
    %v619 = vunpack.c.l.b16 %v581
    %v620 = vunpack.c.l.b16 %v582
    %v621 = vunpack.c.l.b16 %v583
    %v622 = vunpack.c.l.b16 %v584
    %v623 = vunpack.c.l.b16 %v585
    %v624 = vunpack.c.l.b16 %v586
    %v625 = vunpack.c.l.b16 %v587
    %v626 = vpack.c.b16 %v611, %v610
    %v627 = vpack.c.b16 %v613, %v612
    %v628 = vpack.c.b16 %v615, %v614
    %v629 = vpack.c.b16 %v617, %v616
    %v630 = vpack.c.b16 %v619, %v618
    %v631 = vpack.c.b16 %v621, %v620
    %v632 = vpack.c.b16 %v623, %v622
    %v633 = vpack.c.b16 %v625, %v624
    %642 = vmatprep.subr.bf16.mxu0 0
    %643 = vmatpush1.bf16.msra.mxu0 %v626
    %644 = vmatprep.subr.bf16.mxu0 0
    %645 = vmatpush1.bf16.msra.mxu0 %v627
    %646 = vmatprep.subr.bf16.mxu0 0
    %647 = vmatpush1.bf16.msra.mxu0 %v628
    %648 = vmatprep.subr.bf16.mxu0 0
    %649 = vmatpush1.bf16.msra.mxu0 %v629
    %650 = vmatprep.subr.bf16.mxu0 0
    %651 = vmatpush1.bf16.msra.mxu0 %v630
    %652 = vmatprep.subr.bf16.mxu0 0
    %653 = vmatpush1.bf16.msra.mxu0 %v631
    %654 = vmatprep.subr.bf16.mxu0 0
    %655 = vmatpush1.bf16.msra.mxu0 %v632
    %656 = vmatprep.subr.bf16.mxu0 0
    %657 = vmatpush1.bf16.msra.mxu0 %v633
    %658 = vmatprep.subr.bf16.mxu0 0
    %659 = vmatpush1.bf16.msra.mxu0 0
    %660 = vmatprep.subr.bf16.mxu0 0
    %661 = vmatpush1.bf16.msra.mxu0 0
    %662 = vmatprep.subr.bf16.mxu0 0
    %663 = vmatpush1.bf16.msra.mxu0 0
    %664 = vmatprep.subr.bf16.mxu0 0
    %665 = vmatpush1.bf16.msra.mxu0 0
    %666 = vmatprep.subr.bf16.mxu0 0
    %667 = vmatpush1.bf16.msra.mxu0 0
    %668 = vmatprep.subr.bf16.mxu0 0
    %669 = vmatpush1.bf16.msra.mxu0 0
    %670 = vmatprep.subr.bf16.mxu0 0
    %671 = vmatpush1.bf16.msra.mxu0 0
    %672 = vmatprep.subr.bf16.mxu0 0
    %673 = vmatpush1.bf16.msra.mxu0 0
    %674 = vmatprep.mubr.bf16.mxu0 0
    %675 = vmatmul.mubr.bf16.gmra.mrb[0].mxu0 %v589
    %v676 = vpop.f32.mrb[0].mxu0
    %v677 = vadd.f32 %v593, %v676
    %v678 = vpop.f32.mrb[0].mxu0
    %v679 = vpop.f32.mrb[0].mxu0
    %v680 = vpop.f32.mrb[0].mxu0
    %681 = vdwg.mxu0
    %682 = vst [vmem:[#allocation8] sm:$0xff] %v677
    // Predicated region
    $region26: #{tpu_custom_call.1} parent=1 // pred_check
      _
    $region27: #{tpu_custom_call.1} parent=1 // pred_check_branch
      %684 = sbr.rel (0) target = $region29
    $region28: #{tpu_custom_call.1} parent=1 // pred_region
      %s686 = ssub.s32 128, 128
      %687 = vsyncadd [#allocation4], %s686
      %s689 = sshll.u32 [#allocation8], 4
      %s690 = int_to_ptr.vmem [resolvable:$true] %s689
      %692 = dma.vmem_to_hbm [thread:$0]  %s690, 128, %s3, [#allocation4]
    $region29: #{tpu_custom_call.1} parent=1 // pred_fallthru
      _
    // Predicated region
    $region30: #{tpu_custom_call.1} parent=1 // pred_check
      _
    $region31: #{tpu_custom_call.1} parent=1 // pred_check_branch
      %694 = sbr.rel (0) target = $region33
    $region32: #{tpu_custom_call.1} parent=1 // pred_region
      %695 = dma.done [#allocation4], 128
    $region33: #{tpu_custom_call.1} parent=1 // pred_fallthru
      _
    %696 = vsyncpa [#allocation3], 1
    %697 = vsyncpa [#allocation6], 1
    %698 = vsyncpa [#allocation4], 1

</llo_original>
